<compile_context>
chip_gen: v5e
topology: v5e:2x2
jax: 0.10.0
libtpu: 0.0.40
codegen_flags: <defaults>
</compile_context>

<pallas_src>
import functools

import jax
import jax.numpy as jnp
from jax.experimental import pallas as pl
from jax.experimental.pallas import tpu as pltpu

NUM_CLASSES = 101
NUM_CLASSES_PAD = 128   # lane-dense classifier output; sliced to 101 in wrapper
C_MID = 128             # stem conv output channels (lane-dense)
C_RED = 32              # SE bottleneck width


def _pick_row_tile(m):
    """Row tile (multiple of 8).  ~512 rows/tile at real sizes (measured tile
    sweeps reach ~85% of HBM roofline there); smaller at tiny test sizes so the
    streaming reduction still spans >= 2 grid steps."""
    if m >= 4096:
        return 512
    if m >= 256:
        return 128
    return max(8, ((m + 15) // 16) * 8)


# ----------------------------------------------------------------------------
# Kernel 1: fused stem conv (one K=27 bf16 matmul) + masked global-sum pooling.
# ----------------------------------------------------------------------------
def _conv_pool_kernel(x_ref, w_ref, b_ref, o_ref, acc_ref, *,
                      tm, m_valid, m_pad, inv_hw):
    """x_ref:   (tm, 27) bf16  im2col rows of one image (tap-major channels)
       w_ref:   (27, C_MID) bf16 conv weights, row = 3*tap + cin
       b_ref:   (1, C_MID) f32
       o_ref:   (1, C_MID) f32  pooled mean of ReLU(conv+bias) over valid rows
       acc_ref: (1, C_MID) f32  scratch accumulator (persists across row tiles)
    """
    mi = pl.program_id(1)

    @pl.when(mi == 0)
    def _():
        acc_ref[...] = jnp.zeros_like(acc_ref)

    # Single K=27 matmul with bf16 operands, f32 accumulation on the MXU.
    z = jnp.dot(x_ref[...], w_ref[...], preferred_element_type=jnp.float32)
    z = jnp.maximum(z + b_ref[...], 0.0)                 # f32 VPU (v5e-safe)

    if m_pad != m_valid:
        # Tail tile exists: zero contributions from rows >= H*W.
        rows = jax.lax.broadcasted_iota(jnp.int32, (tm, 1), 0) + mi * tm
        z = jnp.where(rows < m_valid, z, 0.0)

    acc_ref[...] += jnp.sum(z, axis=0, keepdims=True)

    @pl.when(mi == pl.num_programs(1) - 1)
    def _():
        o_ref[...] = acc_ref[...] * inv_hw


# ----------------------------------------------------------------------------
# Kernel 2: batched SE gate + linear classifier on the pooled (N, C) matrix.
# ----------------------------------------------------------------------------
def _head_kernel(s_ref, w1_ref, b1_ref, w2_ref, b2_ref, wf_ref, bf_ref, o_ref):
    s = s_ref[...]                                                   # (N, C)
    z = jnp.maximum(
        jnp.dot(s, w1_ref[...], preferred_element_type=jnp.float32) + b1_ref[...],
        0.0)
    g = jax.nn.sigmoid(
        jnp.dot(z, w2_ref[...], preferred_element_type=jnp.float32) + b2_ref[...])
    # gate is constant over HW, so pooled * gate == mean_hw(feat * gate)
    o_ref[...] = (jnp.dot(s * g, wf_ref[...], preferred_element_type=jnp.float32)
                  + bf_ref[...])


# ----------------------------------------------------------------------------
# Wrapper
# ----------------------------------------------------------------------------
def teacher_forward(x_nchw, params):
    """x_nchw: float32 [N, 3, H, W] -> logits [N, 101]."""
    n, cin, h, w = x_nchw.shape
    m = h * w
    tm = _pick_row_tile(m)
    mt = pl.cdiv(m, tm)
    m_pad = mt * tm
    k27 = 9 * cin

    x = jnp.transpose(x_nchw, (0, 2, 3, 1)).astype(jnp.float32)          # NHWC
    xp = jnp.pad(x, ((0, 0), (1, 1), (1, 1), (0, 0)))
    # 3x3 im2col -> (N, H*W, 27).  At cin=3 this read is far smaller than the
    # (M, 128) feature map it replaces (which is never materialised in HBM).
    taps = [xp[:, i:i + h, j:j + w, :] for i in range(3) for j in range(3)]
    cols = jnp.concatenate(taps, axis=-1).reshape(n, m, k27)
    if m_pad > m:
        cols = jnp.pad(cols, ((0, 0), (0, m_pad - m), (0, 0)))
    cols = cols.astype(jnp.bfloat16)                      # bf16 MXU operands
    w27 = params["w_conv"].reshape(k27, C_MID).astype(jnp.bfloat16)

    conv_kernel = functools.partial(
        _conv_pool_kernel, tm=tm, m_valid=m, m_pad=m_pad, inv_hw=1.0 / float(m))

    # TODO(synk): raise vmem_limit_bytes toward 64-96 MiB on v5e/v6e (128 MiB
    #             physical) and keep <=32-48 MiB on v7x; per-step VMEM here is
    #             only a few hundred KiB so 32 MiB is safe on every generation.
    pooled = pl.pallas_call(
        conv_kernel,
        grid=(n, mt),
        in_specs=[
            pl.BlockSpec((None, tm, k27), lambda b, mi: (b, mi, 0)),
            pl.BlockSpec((k27, C_MID), lambda b, mi: (0, 0)),
            pl.BlockSpec((1, C_MID), lambda b, mi: (0, 0)),
        ],
        out_specs=pl.BlockSpec((None, 1, C_MID), lambda b, mi: (b, 0, 0)),
        out_shape=jax.ShapeDtypeStruct((n, 1, C_MID), jnp.float32),
        scratch_shapes=[pltpu.VMEM((1, C_MID), jnp.float32)],
        compiler_params=pltpu.CompilerParams(
            dimension_semantics=("parallel", "arbitrary"),
            vmem_limit_bytes=32 * 1024 * 1024,
        ),
    )(cols, w27, params["b_conv"])

    pooled = pooled.reshape(n, C_MID)

    logits_pad = pl.pallas_call(
        _head_kernel,
        grid=(1,),
        in_specs=[
            pl.BlockSpec((n, C_MID), lambda i: (0, 0)),
            pl.BlockSpec((C_MID, C_RED), lambda i: (0, 0)),
            pl.BlockSpec((1, C_RED), lambda i: (0, 0)),
            pl.BlockSpec((C_RED, C_MID), lambda i: (0, 0)),
            pl.BlockSpec((1, C_MID), lambda i: (0, 0)),
            pl.BlockSpec((C_MID, NUM_CLASSES_PAD), lambda i: (0, 0)),
            pl.BlockSpec((1, NUM_CLASSES_PAD), lambda i: (0, 0)),
        ],
        out_specs=pl.BlockSpec((n, NUM_CLASSES_PAD), lambda i: (0, 0)),
        out_shape=jax.ShapeDtypeStruct((n, NUM_CLASSES_PAD), jnp.float32),
        compiler_params=pltpu.CompilerParams(
            dimension_semantics=("arbitrary",),
        ),
    )(pooled, params["w_se1"], params["b_se1"],
      params["w_se2"], params["b_se2"], params["w_fc"], params["b_fc"])

    return logits_pad[:, :NUM_CLASSES]


def init_params(key, cin=3):
    ks = jax.random.split(key, 4)
    scale = 0.05
    return {
        "w_conv": scale * jax.random.normal(ks[0], (9, cin, C_MID), jnp.float32),
        "b_conv": jnp.zeros((1, C_MID), jnp.float32),
        "w_se1": scale * jax.random.normal(ks[1], (C_MID, C_RED), jnp.float32),
        "b_se1": jnp.zeros((1, C_RED), jnp.float32),
        "w_se2": scale * jax.random.normal(ks[2], (C_RED, C_MID), jnp.float32),
        "b_se2": jnp.zeros((1, C_MID), jnp.float32),
        "w_fc": scale * jax.random.normal(ks[3], (C_MID, NUM_CLASSES_PAD), jnp.float32),
        "b_fc": jnp.zeros((1, NUM_CLASSES_PAD), jnp.float32),
    }


# ----------------------------------------------------------------------------
# Pure-JAX reference (f32 throughout) for a correctness check.
# ----------------------------------------------------------------------------
def teacher_forward_ref(x_nchw, params):
    n, cin, h, w = x_nchw.shape
    x = jnp.transpose(x_nchw, (0, 2, 3, 1)).astype(jnp.float32)
    xp = jnp.pad(x, ((0, 0), (1, 1), (1, 1), (0, 0)))
    c_mid = params["w_conv"].shape[-1]
    feat = jnp.zeros((n, h, w, c_mid), jnp.float32)
    for t in range(9):
        i, j = divmod(t, 3)
        feat = feat + jnp.einsum("nhwc,cd->nhwd",
                                 xp[:, i:i + h, j:j + w, :], params["w_conv"][t])
    feat = jnp.maximum(feat + params["b_conv"], 0.0)
    s = feat.reshape(n, h * w, c_mid).mean(axis=1)
    z = jnp.maximum(s @ params["w_se1"] + params["b_se1"], 0.0)
    g = jax.nn.sigmoid(z @ params["w_se2"] + params["b_se2"])
    logits = (s * g) @ params["w_fc"] + params["b_fc"]
    return logits[:, :NUM_CLASSES]


if __name__ == "__main__":
    key = jax.random.PRNGKey(0)
    k_x, k_p = jax.random.split(key)

    # Small NCHW input consistent with an RGB image classifier.
    x = jax.random.normal(k_x, (2, 3, 16, 16), jnp.float32)
    params = init_params(k_p)

    logits = jax.jit(teacher_forward)(x, params)
    logits = jax.block_until_ready(logits)

    assert logits.shape == (2, NUM_CLASSES)
    assert logits.dtype == jnp.float32
    assert bool(jnp.all(jnp.isfinite(logits)))

    ref = teacher_forward_ref(x, params)
    max_err = float(jnp.max(jnp.abs(logits - ref)))
    assert bool(jnp.allclose(logits, ref, rtol=2e-2, atol=2e-2)), max_err

    print("KERNEL_OK")
</pallas_src>

<mosaic_0001>
module attributes {stable_mosaic.version = 11 : i64} {
  func.func @_conv_pool_kernel(%arg0: i32, %arg1: i32, %arg2: memref<1x128x27xbf16, #tpu.memory_space<vmem>>, %arg3: memref<27x128xbf16, #tpu.memory_space<vmem>>, %arg4: memref<1x128xf32, #tpu.memory_space<vmem>>, %arg5: memref<1x1x128xf32, #tpu.memory_space<vmem>>, %arg6: memref<1x128xf32, #tpu.memory_space<vmem>>) attributes {dimension_semantics = [#tpu.dimension_semantics<parallel>, #tpu.dimension_semantics<arbitrary>], iteration_bounds = array<i64: 2, 2>, scalar_prefetch = 0 : i64, scratch_operands = 1 : i64, tpu.core_type = #tpu.core_type<tc>, window_params = [{transform_indices = @transform_0, window_bounds = array<i64: 1, 128, 27>}, {pipeline_mode = #tpu.pipeline_mode<synchronous>, transform_indices = @transform_1, window_bounds = array<i64: 27, 128>}, {pipeline_mode = #tpu.pipeline_mode<synchronous>, transform_indices = @transform_2, window_bounds = array<i64: 1, 128>}, {transform_indices = @transform_3, window_bounds = array<i64: 1, 1, 128>}]} {
    %c0_i32 = arith.constant 0 : i32
    %0 = arith.cmpi eq, %arg1, %c0_i32 : i32
    %1 = arith.extui %0 : i1 to i32
    %c0_i32_0 = arith.constant 0 : i32
    %2 = arith.cmpi ne, %1, %c0_i32_0 : i32
    scf.if %2 {
      %cst_14 = arith.constant 0.000000e+00 : f32
      %20 = vector.broadcast %cst_14 : f32 to vector<1x128xf32>
      %c0_15 = arith.constant 0 : index
      %c0_16 = arith.constant 0 : index
      %21 = vector.load %arg6[%c0_15, %c0_16] : memref<1x128xf32, #tpu.memory_space<vmem>>, vector<1x128xf32>
      tpu.vector_store %arg6[%c0_15, %c0_16], %20 {strides = array<i32>} : memref<1x128xf32, #tpu.memory_space<vmem>>, vector<1x128xf32>,
    } else {
    }
    %c0 = arith.constant 0 : index
    %c0_1 = arith.constant 0 : index
    %c0_2 = arith.constant 0 : index
    %3 = vector.load %arg2[%c0, %c0_1, %c0_2] : memref<1x128x27xbf16, #tpu.memory_space<vmem>>, vector<1x128x27xbf16>
    %4 = vector.shape_cast %3 : vector<1x128x27xbf16> to vector<128x27xbf16>
    %c0_3 = arith.constant 0 : index
    %c0_4 = arith.constant 0 : index
    %5 = vector.load %arg3[%c0_3, %c0_4] : memref<27x128xbf16, #tpu.memory_space<vmem>>, vector<27x128xbf16>
    %cst = arith.constant dense<0.000000e+00> : vector<128x128xf32>
    %6 = tpu.matmul %4, %5, %cst {dimension_numbers = #tpu.dot_dimension_numbers<[1], [0], [0], [1], [0, 0, 1, 1], [], []>} : vector<128x27xbf16>, vector<27x128xbf16>, vector<128x128xf32> -> vector<128x128xf32>
    %c0_5 = arith.constant 0 : index
    %c0_6 = arith.constant 0 : index
    %7 = vector.load %arg4[%c0_5, %c0_6] : memref<1x128xf32, #tpu.memory_space<vmem>>, vector<1x128xf32>
    %8 = vector.broadcast %7 : vector<1x128xf32> to vector<128x128xf32>
    %9 = arith.addf %6, %8 : vector<128x128xf32>
    %cst_7 = arith.constant 0.000000e+00 : f32
    %10 = vector.broadcast %cst_7 : f32 to vector<128x128xf32>
    %11 = arith.maximumf %9, %10 : vector<128x128xf32>
    %c0_8 = arith.constant 0 : index
    %c0_9 = arith.constant 0 : index
    %12 = vector.load %arg6[%c0_8, %c0_9] : memref<1x128xf32, #tpu.memory_space<vmem>>, vector<1x128xf32>
    %cst_10 = arith.constant dense<0.000000e+00> : vector<128xf32>
    %13 = vector.multi_reduction <add>, %11, %cst_10 [0] : vector<128x128xf32> to vector<128xf32>
    %14 = vector.shape_cast %13 : vector<128xf32> to vector<1x128xf32>
    %15 = arith.addf %12, %14 : vector<1x128xf32>
    %c0_11 = arith.constant 0 : index
    %c0_12 = arith.constant 0 : index
    %16 = vector.load %arg6[%c0_11, %c0_12] : memref<1x128xf32, #tpu.memory_space<vmem>>, vector<1x128xf32>
    tpu.vector_store %arg6[%c0_11, %c0_12], %15 {strides = array<i32>} : memref<1x128xf32, #tpu.memory_space<vmem>>, vector<1x128xf32>,
    %c1_i32 = arith.constant 1 : i32
    %17 = arith.cmpi eq, %arg1, %c1_i32 : i32
    %18 = arith.extui %17 : i1 to i32
    %c0_i32_13 = arith.constant 0 : i32
    %19 = arith.cmpi ne, %18, %c0_i32_13 : i32
    scf.if %19 {
      %c0_14 = arith.constant 0 : index
      %c0_15 = arith.constant 0 : index
      %20 = vector.load %arg6[%c0_14, %c0_15] : memref<1x128xf32, #tpu.memory_space<vmem>>, vector<1x128xf32>
      %cst_16 = arith.constant 3.906250e-03 : f32
      %21 = vector.broadcast %cst_16 : f32 to vector<1x128xf32>
      %22 = arith.mulf %20, %21 : vector<1x128xf32>
      %c0_17 = arith.constant 0 : index
      %c0_18 = arith.constant 0 : index
      %c0_19 = arith.constant 0 : index
      %23 = vector.load %arg5[%c0_17, %c0_18, %c0_19] : memref<1x1x128xf32, #tpu.memory_space<vmem>>, vector<1x1x128xf32>
      %24 = vector.shape_cast %23 : vector<1x1x128xf32> to vector<1x128xf32>
      %25 = vector.shape_cast %22 : vector<1x128xf32> to vector<1x1x128xf32>
      tpu.vector_store %arg5[%c0_17, %c0_18, %c0_19], %25 {strides = array<i32>} : memref<1x1x128xf32, #tpu.memory_space<vmem>>, vector<1x1x128xf32>,
    } else {
    }
    return
  }
  func.func @transform_0(%arg0: i32, %arg1: i32) -> (i32, i32, i32) {
    %c0_i32 = arith.constant 0 : i32
    %c0_i32_0 = arith.constant 0 : i32
    return %arg0, %arg1, %c0_i32 : i32, i32, i32
  }
  func.func @transform_1(%arg0: i32, %arg1: i32) -> (i32, i32) {
    %c0_i32 = arith.constant 0 : i32
    %c0_i32_0 = arith.constant 0 : i32
    %c0_i32_1 = arith.constant 0 : i32
    return %c0_i32, %c0_i32_0 : i32, i32
  }
  func.func @transform_2(%arg0: i32, %arg1: i32) -> (i32, i32) {
    %c0_i32 = arith.constant 0 : i32
    %c0_i32_0 = arith.constant 0 : i32
    %c0_i32_1 = arith.constant 0 : i32
    return %c0_i32, %c0_i32_0 : i32, i32
  }
  func.func @transform_3(%arg0: i32, %arg1: i32) -> (i32, i32, i32) {
    %c0_i32 = arith.constant 0 : i32
    %c0_i32_0 = arith.constant 0 : i32
    %c0_i32_1 = arith.constant 0 : i32
    return %arg0, %c0_i32, %c0_i32_0 : i32, i32, i32
  }
}

module attributes {stable_mosaic.version = 11 : i64} {
  func.func @_head_kernel(%arg0: i32, %arg1: memref<2x128xf32, #tpu.memory_space<vmem>>, %arg2: memref<128x32xf32, #tpu.memory_space<vmem>>, %arg3: memref<1x32xf32, #tpu.memory_space<vmem>>, %arg4: memref<32x128xf32, #tpu.memory_space<vmem>>, %arg5: memref<1x128xf32, #tpu.memory_space<vmem>>, %arg6: memref<128x128xf32, #tpu.memory_space<vmem>>, %arg7: memref<1x128xf32, #tpu.memory_space<vmem>>, %arg8: memref<2x128xf32, #tpu.memory_space<vmem>>) attributes {dimension_semantics = [#tpu.dimension_semantics<arbitrary>], iteration_bounds = array<i64: 1>, scalar_prefetch = 0 : i64, scratch_operands = 0 : i64, tpu.core_type = #tpu.core_type<tc>, window_params = [{pipeline_mode = #tpu.pipeline_mode<synchronous>, transform_indices = @transform_0, window_bounds = array<i64: 2, 128>}, {pipeline_mode = #tpu.pipeline_mode<synchronous>, transform_indices = @transform_1, window_bounds = array<i64: 128, 32>}, {pipeline_mode = #tpu.pipeline_mode<synchronous>, transform_indices = @transform_2, window_bounds = array<i64: 1, 32>}, {pipeline_mode = #tpu.pipeline_mode<synchronous>, transform_indices = @transform_3, window_bounds = array<i64: 32, 128>}, {pipeline_mode = #tpu.pipeline_mode<synchronous>, transform_indices = @transform_4, window_bounds = array<i64: 1, 128>}, {pipeline_mode = #tpu.pipeline_mode<synchronous>, transform_indices = @transform_5, window_bounds = array<i64: 128, 128>}, {pipeline_mode = #tpu.pipeline_mode<synchronous>, transform_indices = @transform_6, window_bounds = array<i64: 1, 128>}, {pipeline_mode = #tpu.pipeline_mode<synchronous>, transform_indices = @transform_7, window_bounds = array<i64: 2, 128>}]} {
    %c0 = arith.constant 0 : index
    %c0_0 = arith.constant 0 : index
    %0 = vector.load %arg1[%c0, %c0_0] : memref<2x128xf32, #tpu.memory_space<vmem>>, vector<2x128xf32>
    %c0_1 = arith.constant 0 : index
    %c0_2 = arith.constant 0 : index
    %1 = vector.load %arg2[%c0_1, %c0_2] : memref<128x32xf32, #tpu.memory_space<vmem>>, vector<128x32xf32>
    %cst = arith.constant dense<0.000000e+00> : vector<2x32xf32>
    %2 = tpu.matmul %0, %1, %cst {dimension_numbers = #tpu.dot_dimension_numbers<[1], [0], [0], [1], [0, 0, 1, 1], [], []>} : vector<2x128xf32>, vector<128x32xf32>, vector<2x32xf32> -> vector<2x32xf32>
    %c0_3 = arith.constant 0 : index
    %c0_4 = arith.constant 0 : index
    %3 = vector.load %arg3[%c0_3, %c0_4] : memref<1x32xf32, #tpu.memory_space<vmem>>, vector<1x32xf32>
    %4 = vector.broadcast %3 : vector<1x32xf32> to vector<2x32xf32>
    %5 = arith.addf %2, %4 : vector<2x32xf32>
    %cst_5 = arith.constant 0.000000e+00 : f32
    %6 = vector.broadcast %cst_5 : f32 to vector<2x32xf32>
    %7 = arith.maximumf %5, %6 : vector<2x32xf32>
    %c0_6 = arith.constant 0 : index
    %c0_7 = arith.constant 0 : index
    %8 = vector.load %arg4[%c0_6, %c0_7] : memref<32x128xf32, #tpu.memory_space<vmem>>, vector<32x128xf32>
    %cst_8 = arith.constant dense<0.000000e+00> : vector<2x128xf32>
    %9 = tpu.matmul %7, %8, %cst_8 {dimension_numbers = #tpu.dot_dimension_numbers<[1], [0], [0], [1], [0, 0, 1, 1], [], []>} : vector<2x32xf32>, vector<32x128xf32>, vector<2x128xf32> -> vector<2x128xf32>
    %c0_9 = arith.constant 0 : index
    %c0_10 = arith.constant 0 : index
    %10 = vector.load %arg5[%c0_9, %c0_10] : memref<1x128xf32, #tpu.memory_space<vmem>>, vector<1x128xf32>
    %11 = vector.broadcast %10 : vector<1x128xf32> to vector<2x128xf32>
    %12 = arith.addf %9, %11 : vector<2x128xf32>
    %13 = arith.negf %12 : vector<2x128xf32>
    %14 = math.exp %13 : vector<2x128xf32>
    %cst_11 = arith.constant 1.000000e+00 : f32
    %15 = vector.broadcast %cst_11 : f32 to vector<2x128xf32>
    %16 = arith.addf %15, %14 : vector<2x128xf32>
    %17 = arith.divf %15, %16 : vector<2x128xf32>
    %18 = arith.mulf %0, %17 : vector<2x128xf32>
    %c0_12 = arith.constant 0 : index
    %c0_13 = arith.constant 0 : index
    %19 = vector.load %arg6[%c0_12, %c0_13] : memref<128x128xf32, #tpu.memory_space<vmem>>, vector<128x128xf32>
    %cst_14 = arith.constant dense<0.000000e+00> : vector<2x128xf32>
    %20 = tpu.matmul %18, %19, %cst_14 {dimension_numbers = #tpu.dot_dimension_numbers<[1], [0], [0], [1], [0, 0, 1, 1], [], []>} : vector<2x128xf32>, vector<128x128xf32>, vector<2x128xf32> -> vector<2x128xf32>
    %c0_15 = arith.constant 0 : index
    %c0_16 = arith.constant 0 : index
    %21 = vector.load %arg7[%c0_15, %c0_16] : memref<1x128xf32, #tpu.memory_space<vmem>>, vector<1x128xf32>
    %22 = vector.broadcast %21 : vector<1x128xf32> to vector<2x128xf32>
    %23 = arith.addf %20, %22 : vector<2x128xf32>
    %c0_17 = arith.constant 0 : index
    %c0_18 = arith.constant 0 : index
    %24 = vector.load %arg8[%c0_17, %c0_18] : memref<2x128xf32, #tpu.memory_space<vmem>>, vector<2x128xf32>
    tpu.vector_store %arg8[%c0_17, %c0_18], %23 {strides = array<i32>} : memref<2x128xf32, #tpu.memory_space<vmem>>, vector<2x128xf32>,
    return
  }
  func.func @transform_0(%arg0: i32) -> (i32, i32) {
    %c0_i32 = arith.constant 0 : i32
    %c0_i32_0 = arith.constant 0 : i32
    %c0_i32_1 = arith.constant 0 : i32
    return %c0_i32, %c0_i32_0 : i32, i32
  }
  func.func @transform_1(%arg0: i32) -> (i32, i32) {
    %c0_i32 = arith.constant 0 : i32
    %c0_i32_0 = arith.constant 0 : i32
    %c0_i32_1 = arith.constant 0 : i32
    return %c0_i32, %c0_i32_0 : i32, i32
  }
  func.func @transform_2(%arg0: i32) -> (i32, i32) {
    %c0_i32 = arith.constant 0 : i32
    %c0_i32_0 = arith.constant 0 : i32
    %c0_i32_1 = arith.constant 0 : i32
    return %c0_i32, %c0_i32_0 : i32, i32
  }
  func.func @transform_3(%arg0: i32) -> (i32, i32) {
    %c0_i32 = arith.constant 0 : i32
    %c0_i32_0 = arith.constant 0 : i32
    %c0_i32_1 = arith.constant 0 : i32
    return %c0_i32, %c0_i32_0 : i32, i32
  }
  func.func @transform_4(%arg0: i32) -> (i32, i32) {
    %c0_i32 = arith.constant 0 : i32
    %c0_i32_0 = arith.constant 0 : i32
    %c0_i32_1 = arith.constant 0 : i32
    return %c0_i32, %c0_i32_0 : i32, i32
  }
  func.func @transform_5(%arg0: i32) -> (i32, i32) {
    %c0_i32 = arith.constant 0 : i32
    %c0_i32_0 = arith.constant 0 : i32
    %c0_i32_1 = arith.constant 0 : i32
    return %c0_i32, %c0_i32_0 : i32, i32
  }
  func.func @transform_6(%arg0: i32) -> (i32, i32) {
    %c0_i32 = arith.constant 0 : i32
    %c0_i32_0 = arith.constant 0 : i32
    %c0_i32_1 = arith.constant 0 : i32
    return %c0_i32, %c0_i32_0 : i32, i32
  }
  func.func @transform_7(%arg0: i32) -> (i32, i32) {
    %c0_i32 = arith.constant 0 : i32
    %c0_i32_0 = arith.constant 0 : i32
    %c0_i32_1 = arith.constant 0 : i32
    return %c0_i32, %c0_i32_0 : i32, i32
  }
}

</mosaic_0001>

<llo_original>
// kernel: teacher_forward.2
$region0: #{teacher_forward.2}
  #allocation0 [shape = 'u32[]', space=smem, size = 0x4, offset = 0x4, fixed_abs, tag = 'smem constant byte address 0x4 - core index']
  #allocation1 [shape = 'u32[72,128]{1,0:T(1,128)}', space=vmem, size = 0x9000, scoped, tag = 'internal scratch']
  #allocation2 [shape = 'f32[1,128]{1,0:T(1,128)}', space=vmem, size = 0x200, scoped, tag = 'scratch operand']
  %s0 = inlined_call_operand.vmem [shape: bf16[2,256,27], index: 0, kind: input, shape index: {}]
  %s1 = inlined_call_operand.vmem [shape: bf16[27,128], index: 1, kind: input, shape index: {}]
  %s2 = inlined_call_operand.vmem [shape: f32[1,128], index: 2, kind: input, shape index: {}]
  %s3 = inlined_call_operand.vmem [shape: f32[2,1,128], index: 3, kind: output, shape index: {}]
  %s4 = sld [smem:[#allocation0]]
  $region53: #{teacher_forward.2} parent=0
    _
  %s6 = ssub.s32 1, %s4
  %s7 = scalar_select 0, %s6, %s4
  loop: start=0, step=1, limit=6
  $region2: #{teacher_forward.2} parent=0 // loop_pre_header
    _
  $region3: #{teacher_forward.2} parent=0 // loop_header
    %s9 = sphi 0, %s13
    %p10 = scmp.ge.s32.totalorder %s9, 6
    %s16 = sphi 0, %s28
    %s17 = sphi 0, %s24
    %s18 = sphi 0, %s16
    %s19 = sphi 0, %s17
    %s20 = sphi 0, %s18
    %s21 = sphi 0, %s19
    %s33 = sphi 0, %s35
    %s36 = sphi 0, %s33
    %s37 = sphi 0, %s36
    %s53 = sphi 0, %s37
    %s57 = sphi 0, %s57
    %s59 = sphi 0, %s57
    %s60 = sphi 0, %s59
    %s74 = sphi 0, %s60
    %s78 = sphi 0, %s78
    %s80 = sphi 0, %s78
    %s81 = sphi 0, %s80
    %s95 = sphi 0, %s81
    %s101 = sphi 0, %s103
    %s104 = sphi 0, %s101
    %s105 = sphi 0, %s104
    %s121 = sphi 0, %s105
  $region4: #{teacher_forward.2} parent=0 // loop_header_branch
    %12 = sbr.rel (%p10) target = $region8
  $region5: #{teacher_forward.2} parent=0 // loop_body
    %s14 = ssub.s32 %s9, 1
    %s15 = ssub.s32 %s9, 2
    %s22 = sadd.s32 1, %s17
    %p23 = scmp.ge.s32.totalorder %s22, 2
    %s24 = scalar_select %p23, 0, %s22
    %s25 = sadd.s32 1, %s16
    %s26 = scalar_select %p23, %s25, %s16
    %p27 = scmp.ge.s32.totalorder %s26, 2
    %s28 = scalar_select %p27, 0, %s26
    %s29 = ssub.s32 %s16, %s28
    %s30 = ssub.s32 %s17, %s24
    %s31 = sor.u32 %s29, %s30
    %p32 = scmp.eq.s32.totalorder %s31, 0
    %s34 = sadd.s32 %s33, 1
    %s35 = scalar_select %p32, %s33, %s34
    %p38 = pneg %p32
    %p39 = scmp.eq.s32.totalorder %s9, 3
    %p40 = por %p38, %p39
    %p41 = scmp.ne.s32.totalorder %s33, %s36
    %p42 = scmp.eq.s32.totalorder %s9, 0
    %p43 = por %p41, %p42
    %p44 = scmp.ne.s32.totalorder %s33, %s36
    %p45 = scmp.eq.s32.totalorder %s14, 3
    %p46 = por %p44, %p45
    %p47 = scmp.ne.s32.totalorder %s36, %s37
    %p48 = scmp.eq.s32.totalorder %s14, 0
    %p49 = por %p47, %p48
    %p50 = scmp.ne.s32.totalorder %s36, %s37
    %p51 = scmp.eq.s32.totalorder %s15, 3
    %p52 = por %p50, %p51
    %p54 = scmp.ne.s32.totalorder %s37, %s53
    %p55 = scmp.eq.s32.totalorder %s15, 0
    %p56 = por %p54, %p55
    %s58 = sadd.s32 %s57, 1
    %p61 = scmp.eq.s32.totalorder %s9, 3
    %p62 = scmp.ne.s32.totalorder %s57, %s59
    %p63 = scmp.eq.s32.totalorder %s9, 0
    %p64 = por %p62, %p63
    %p65 = scmp.ne.s32.totalorder %s57, %s59
    %p66 = scmp.eq.s32.totalorder %s14, 3
    %p67 = por %p65, %p66
    %p68 = scmp.ne.s32.totalorder %s59, %s60
    %p69 = scmp.eq.s32.totalorder %s14, 0
    %p70 = por %p68, %p69
    %p71 = scmp.ne.s32.totalorder %s59, %s60
    %p72 = scmp.eq.s32.totalorder %s15, 3
    %p73 = por %p71, %p72
    %p75 = scmp.ne.s32.totalorder %s60, %s74
    %p76 = scmp.eq.s32.totalorder %s15, 0
    %p77 = por %p75, %p76
    %s79 = sadd.s32 %s78, 1
    %p82 = scmp.eq.s32.totalorder %s9, 3
    %p83 = scmp.ne.s32.totalorder %s78, %s80
    %p84 = scmp.eq.s32.totalorder %s9, 0
    %p85 = por %p83, %p84
    %p86 = scmp.ne.s32.totalorder %s78, %s80
    %p87 = scmp.eq.s32.totalorder %s14, 3
    %p88 = por %p86, %p87
    %p89 = scmp.ne.s32.totalorder %s80, %s81
    %p90 = scmp.eq.s32.totalorder %s14, 0
    %p91 = por %p89, %p90
    %p92 = scmp.ne.s32.totalorder %s80, %s81
    %p93 = scmp.eq.s32.totalorder %s15, 3
    %p94 = por %p92, %p93
    %p96 = scmp.ne.s32.totalorder %s81, %s95
    %p97 = scmp.eq.s32.totalorder %s15, 0
    %p98 = por %p96, %p97
    %s99 = ssub.s32 %s16, %s28
    %p100 = scmp.eq.s32.totalorder %s99, 0
    %s102 = sadd.s32 %s101, 1
    %s103 = scalar_select %p100, %s101, %s102
    %p106 = pneg %p100
    %p107 = scmp.eq.s32.totalorder %s9, 3
    %p108 = por %p106, %p107
    %p109 = scmp.ne.s32.totalorder %s101, %s104
    %p110 = scmp.eq.s32.totalorder %s9, 0
    %p111 = por %p109, %p110
    %p112 = scmp.ne.s32.totalorder %s101, %s104
    %p113 = scmp.eq.s32.totalorder %s14, 3
    %p114 = por %p112, %p113
    %p115 = scmp.ne.s32.totalorder %s104, %s105
    %p116 = scmp.eq.s32.totalorder %s14, 0
    %p117 = por %p115, %p116
    %p118 = scmp.ne.s32.totalorder %s104, %s105
    %p119 = scmp.eq.s32.totalorder %s15, 3
    %p120 = por %p118, %p119
    %p122 = scmp.ne.s32.totalorder %s105, %s121
    %p123 = scmp.eq.s32.totalorder %s15, 0
    %p124 = por %p122, %p123
    %p125 = scmp.le.s32.totalorder 1, %s9
    %p126 = scmp.lt.s32.totalorder %s9, 5
    %p127 = pnand %p125, %p126
    %p128 = pneg %p127
    // Predicated region
    $region9: #{teacher_forward.2} parent=5 // pred_check
      _
    $region10: #{teacher_forward.2} parent=5 // pred_check_branch
      %130 = sbr.rel (%p127) target = $region12
    $region11: #{teacher_forward.2} parent=5 // pred_region
      %s131 = ssub.s32 %s9, 1
      // Predicated region
      $region13: #{teacher_forward.2} parent=11 // pred_check
        %p132 = pneg %p70
      $region14: #{teacher_forward.2} parent=11 // pred_check_branch
        %134 = sbr.rel (%p132) target = $region16
      $region15: #{teacher_forward.2} parent=11 // pred_region
        _
      $region16: #{teacher_forward.2} parent=11 // pred_fallthru
        _
      // Predicated region
      $region17: #{teacher_forward.2} parent=11 // pred_check
        %p135 = pneg %p91
      $region18: #{teacher_forward.2} parent=11 // pred_check_branch
        %137 = sbr.rel (%p135) target = $region20
      $region19: #{teacher_forward.2} parent=11 // pred_region
        _
      $region20: #{teacher_forward.2} parent=11 // pred_fallthru
        _
    $region12: #{teacher_forward.2} parent=5 // pred_fallthru
      _
    %p138 = scmp.lt.s32.totalorder %s9, 4
    // Predicated region
    $region21: #{teacher_forward.2} parent=5 // pred_check
      %p139 = pneg %p138
    $region22: #{teacher_forward.2} parent=5 // pred_check_branch
      %141 = sbr.rel (%p139) target = $region24
    $region23: #{teacher_forward.2} parent=5 // pred_region
      // Predicated region
      $region25: #{teacher_forward.2} parent=23 // pred_check
        %p142 = pneg %p43
      $region26: #{teacher_forward.2} parent=23 // pred_check_branch
        %144 = sbr.rel (%p142) target = $region28
      $region27: #{teacher_forward.2} parent=23 // pred_region
        %s145 = smul.u32 16, %s17
        %p146 = scmp.lt.s32.totalorder %s16, 1
        %s147 = scalar_select %p146, %s16, 1
        %p148 = scmp.lt.s32.totalorder %s145, 31
        %s149 = scalar_select %p148, %s145, 31
        %s150 = smul.addr %s147, 32
        %s151 = sadd.s32 %s149, %s150
        %s152 = smul.addr %s151, 4
        %s153 = scalar_lea.vmem %s0, %s152
        %s154 = smul.u32 16, %s17
      $region28: #{teacher_forward.2} parent=23 // pred_fallthru
        _
    $region24: #{teacher_forward.2} parent=5 // pred_fallthru
      _
    %p155 = scmp.le.s32.totalorder 1, %s9
    %p156 = scmp.lt.s32.totalorder %s9, 5
    %p157 = pnand %p155, %p156
    %p158 = pneg %p157
    // Predicated region
    $region29: #{teacher_forward.2} parent=5 // pred_check
      _
    $region30: #{teacher_forward.2} parent=5 // pred_check_branch
      %160 = sbr.rel (%p157) target = $region32
    $region31: #{teacher_forward.2} parent=5 // pred_region
      %s161 = ssub.s32 %s9, 1
      %s162 = smul.u32 16, %s19
      %p163 = scmp.lt.s32.totalorder %s18, 1
      %s164 = scalar_select %p163, %s18, 1
      %p165 = scmp.lt.s32.totalorder %s162, 31
      %s166 = scalar_select %p165, %s162, 31
      %s167 = smul.addr %s164, 32
      %s168 = sadd.s32 %s166, %s167
      %s169 = smul.addr %s168, 4
      %s170 = scalar_lea.vmem %s0, %s169
      %p171 = pneg %p49
      %p172 = pneg %p46
      %p173 = pneg %p70
      %p174 = pneg %p67
      %p175 = pneg %p91
      %p176 = pneg %p88
      %p177 = pneg %p117
      %p178 = pneg %p114
      %p179 = scmp.lt.s32.totalorder %s18, 1
      %s180 = scalar_select %p179, %s18, 1
      %s181 = scalar_lea.vmem %s3, %s180
      %s182 = smul.u32 16, %s19
      %p183 = scmp.lt.s32.totalorder %s18, 1
      %s184 = scalar_select %p183, %s18, 1
      %p185 = scmp.lt.s32.totalorder %s182, 31
      %s186 = scalar_select %p185, %s182, 31
      %s187 = smul.addr %s184, 32
      %s188 = sadd.s32 %s186, %s187
      %s189 = smul.addr %s188, 4
      %s190 = scalar_lea.vmem %s0, %s189
      %s191 = smul.u32 16, %s19
      %p192 = scmp.lt.s32.totalorder %s18, 1
      %s193 = scalar_select %p192, %s18, 1
      %s194 = scalar_lea.vmem %s3, %s193
      %p196 = scmp.eq.s32.totalorder %s19, 0
      // Predicated region
      $region33: #{teacher_forward.2} parent=31 // pred_check
        %p197 = pneg %p196
      $region34: #{teacher_forward.2} parent=31 // pred_check_branch
        %199 = sbr.rel (%p197) target = $region36
      $region35: #{teacher_forward.2} parent=31 // pred_region
        %200 = vst [vmem:[#allocation2] sm:$0x1] 0.0
      $region36: #{teacher_forward.2} parent=31 // pred_fallthru
        _
      %v201 = vld [vmem:[%s190] sm:$0xf]
      %v202 = vld [vmem:[%s190 + $0x4] sm:$0xf]
      %v203 = vld [vmem:[%s190 + $0x8] sm:$0xf]
      %v204 = vld [vmem:[%s190 + $0xc] sm:$0xf]
      %v205 = vld [vmem:[%s190 + $0x10] sm:$0xf]
      %v206 = vld [vmem:[%s190 + $0x14] sm:$0xf]
      %v207 = vld [vmem:[%s190 + $0x18] sm:$0xf]
      %v208 = vld [vmem:[%s190 + $0x1c] sm:$0xf]
      %v209 = vld [vmem:[%s190 + $0x20] sm:$0xf]
      %v210 = vld [vmem:[%s190 + $0x24] sm:$0xf]
      %v211 = vld [vmem:[%s190 + $0x28] sm:$0xf]
      %v212 = vld [vmem:[%s190 + $0x2c] sm:$0xf]
      %v213 = vld [vmem:[%s190 + $0x30] sm:$0xf]
      %v214 = vld [vmem:[%s190 + $0x34] sm:$0xf]
      %v215 = vld [vmem:[%s190 + $0x38] sm:$0xf]
      %v216 = vld [vmem:[%s190 + $0x3c] sm:$0xf]
      %v217 = vld [vmem:[%s1] sm:$0xf]
      %v218 = vld [vmem:[%s1 + $0x4] sm:$0xf]
      %v219 = vld [vmem:[%s1 + $0x8] sm:$0xf]
      %v220 = vld [vmem:[%s1 + $0xc] sm:$0x3]
      %v221 = vld [vmem:[%s2] sm:$0x1]
      %v223 = vperm.slane %v221, 0
      %v241 = vunpack.c.l.b16 %v201
      %v242 = vunpack.c.l.b16 %v202
      %v243 = vunpack.c.l.b16 %v203
      %v244 = vunpack.c.l.b16 %v204
      %v245 = vunpack.c.l.b16 %v205
      %v246 = vunpack.c.l.b16 %v206
      %v247 = vunpack.c.l.b16 %v207
      %v248 = vunpack.c.l.b16 %v208
      %v249 = vunpack.c.l.b16 %v209
      %v250 = vunpack.c.l.b16 %v210
      %v251 = vunpack.c.l.b16 %v211
      %v252 = vunpack.c.l.b16 %v212
      %v253 = vunpack.c.l.b16 %v213
      %v254 = vunpack.c.l.b16 %v214
      %v255 = vunpack.c.l.b16 %v215
      %v256 = vunpack.c.l.b16 %v216
      %v257 = vpack.c.b16 %v242, %v241
      %v258 = vpack.c.b16 %v244, %v243
      %v259 = vpack.c.b16 %v246, %v245
      %v260 = vpack.c.b16 %v248, %v247
      %v261 = vpack.c.b16 %v250, %v249
      %v262 = vpack.c.b16 %v252, %v251
      %v263 = vpack.c.b16 %v254, %v253
      %v264 = vpack.c.b16 %v256, %v255
      %v269 = vunpack.c.l.b16 %v217
      %v270 = vunpack.c.l.b16 %v218
      %v271 = vunpack.c.l.b16 %v219
      %v272 = vunpack.c.l.b16 %v220
      %v273 = vpack.c.b16 %v270, %v269
      %v274 = vpack.c.b16 %v272, %v271
      %vm276 = vcmask 220160
      %v278 = vsel %vm276, %v257, 0
      %v281 = vsel %vm276, %v258, 0
      %v284 = vsel %vm276, %v259, 0
      %v287 = vsel %vm276, %v260, 0
      %v290 = vsel %vm276, %v261, 0
      %v293 = vsel %vm276, %v262, 0
      %v296 = vsel %vm276, %v263, 0
      %v299 = vsel %vm276, %v264, 0
      %vm301 = vcmask 1044480
      %vm302 = vcmask 1045504
      %v303 = vsel %vm301, 4294967295, 65535
      %v304 = vsel %vm302, %v303, 0
      %v306 = vand.u32 %v274, %v304
      %308 = vmatpush.bf16.msra.mxu0 0
      %309 = vmatpush.bf16.msra.mxu0 0
      %310 = vmatpush.bf16.msra.mxu0 0
      %311 = vmatpush.bf16.msra.mxu0 0
      %312 = vmatpush.bf16.msra.mxu0 0
      %313 = vmatpush.bf16.msra.mxu0 0
      %314 = vmatpush.bf16.msra.mxu0 %v306
      %315 = vmatpush.bf16.msra.mxu0 %v273
      %316 = vmatmul.bf16.gmra.mxu0 %v278
      %v317 = vpop.f32.mrf.mxu0
      %v318 = vadd.f32 %v223, %v317
      %v319 = vpop.f32.mrf.mxu0
      %v320 = vadd.f32 %v223, %v319
      %321 = vmatmul.bf16.gmra.mxu0 %v281
      %v322 = vpop.f32.mrf.mxu0
      %v323 = vadd.f32 %v223, %v322
      %v324 = vpop.f32.mrf.mxu0
      %v325 = vadd.f32 %v223, %v324
      %326 = vmatmul.bf16.gmra.mxu0 %v284
      %v327 = vpop.f32.mrf.mxu0
      %v328 = vadd.f32 %v223, %v327
      %v329 = vpop.f32.mrf.mxu0
      %v330 = vadd.f32 %v223, %v329
      %331 = vmatmul.bf16.gmra.mxu0 %v287
      %v332 = vpop.f32.mrf.mxu0
      %v333 = vadd.f32 %v223, %v332
      %v334 = vpop.f32.mrf.mxu0
      %v335 = vadd.f32 %v223, %v334
      %336 = vmatmul.bf16.gmra.mxu0 %v290
      %v337 = vpop.f32.mrf.mxu0
      %v338 = vadd.f32 %v223, %v337
      %v339 = vpop.f32.mrf.mxu0
      %v340 = vadd.f32 %v223, %v339
      %341 = vmatmul.bf16.gmra.mxu0 %v293
      %v342 = vpop.f32.mrf.mxu0
      %v343 = vadd.f32 %v223, %v342
      %v344 = vpop.f32.mrf.mxu0
      %v345 = vadd.f32 %v223, %v344
      %346 = vmatmul.bf16.gmra.mxu0 %v296
      %v347 = vpop.f32.mrf.mxu0
      %v348 = vadd.f32 %v223, %v347
      %v349 = vpop.f32.mrf.mxu0
      %v350 = vadd.f32 %v223, %v349
      %351 = vmatmul.bf16.gmra.mxu0 %v299
      %v352 = vpop.f32.mrf.mxu0
      %v353 = vadd.f32 %v223, %v352
      %v354 = vpop.f32.mrf.mxu0
      %v355 = vadd.f32 %v223, %v354
      %356 = vdwg.mxu0
      %v357 = vmax.f32 %v318, 0.0
      %v358 = vmax.f32 %v320, 0.0
      %v359 = vmax.f32 %v323, 0.0
      %v360 = vmax.f32 %v325, 0.0
      %v361 = vmax.f32 %v328, 0.0
      %v362 = vmax.f32 %v330, 0.0
      %v363 = vmax.f32 %v333, 0.0
      %v364 = vmax.f32 %v335, 0.0
      %v365 = vmax.f32 %v338, 0.0
      %v366 = vmax.f32 %v340, 0.0
      %v367 = vmax.f32 %v343, 0.0
      %v368 = vmax.f32 %v345, 0.0
      %v369 = vmax.f32 %v348, 0.0
      %v370 = vmax.f32 %v350, 0.0
      %v371 = vmax.f32 %v353, 0.0
      %v372 = vmax.f32 %v355, 0.0
      %v373 = vld [vmem:[#allocation2] sm:$0x1]
      %v374 = vadd.f32 %v357, %v358
      %v375 = vadd.f32 %v374, %v359
      %v376 = vadd.f32 %v375, %v360
      %v377 = vadd.f32 %v376, %v361
      %v378 = vadd.f32 %v377, %v362
      %v379 = vadd.f32 %v378, %v363
      %v380 = vadd.f32 %v379, %v364
      %v381 = vadd.f32 %v380, %v365
      %v382 = vadd.f32 %v381, %v366
      %v383 = vadd.f32 %v382, %v367
      %v384 = vadd.f32 %v383, %v368
      %v385 = vadd.f32 %v384, %v369
      %v386 = vadd.f32 %v385, %v370
      %v387 = vadd.f32 %v386, %v371
      %v388 = vadd.f32 %v387, %v372
      %v389 = vrot.slane %v388, 4
      %v390 = vadd.f32 %v388, %v389
      %v391 = vrot.slane %v390, 2
      %v392 = vadd.f32 %v390, %v391
      %v393 = vrot.slane %v392, 1
      %v394 = vadd.f32 %v392, %v393
      %v395 = vadd.f32 %v373, %v394
      %396 = vst [vmem:[#allocation2] sm:$0x1] %v395
      %p397 = scmp.eq.s32.totalorder %s19, 1
      // Predicated region
      $region37: #{teacher_forward.2} parent=31 // pred_check
        %p398 = pneg %p397
      $region38: #{teacher_forward.2} parent=31 // pred_check_branch
        %400 = sbr.rel (%p398) target = $region40
      $region39: #{teacher_forward.2} parent=31 // pred_region
        %v401 = vld [vmem:[#allocation2] sm:$0x1]
        %v402 = vmul.f32 %v401, 0.00390625
        %403 = vst [vmem:[%s194] sm:$0x1] %v402
      $region40: #{teacher_forward.2} parent=31 // pred_fallthru
        _
      %p404 = scmp.lt.s32.totalorder %s18, 1
      %s405 = scalar_select %p404, %s18, 1
      %s406 = scalar_lea.vmem %s3, %s405
      // Predicated region
      $region41: #{teacher_forward.2} parent=31 // pred_check
        %p407 = pneg %p114
      $region42: #{teacher_forward.2} parent=31 // pred_check_branch
        %409 = sbr.rel (%p407) target = $region44
      $region43: #{teacher_forward.2} parent=31 // pred_region
        _
      $region44: #{teacher_forward.2} parent=31 // pred_fallthru
        _
    $region32: #{teacher_forward.2} parent=5 // pred_fallthru
      _
    %p410 = scmp.le.s32.totalorder 2, %s9
    // Predicated region
    $region45: #{teacher_forward.2} parent=5 // pred_check
      %p411 = pneg %p410
    $region46: #{teacher_forward.2} parent=5 // pred_check_branch
      %413 = sbr.rel (%p411) target = $region48
    $region47: #{teacher_forward.2} parent=5 // pred_region
      %s414 = ssub.s32 %s9, 2
      // Predicated region
      $region49: #{teacher_forward.2} parent=47 // pred_check
        %p415 = pneg %p120
      $region50: #{teacher_forward.2} parent=47 // pred_check_branch
        %417 = sbr.rel (%p415) target = $region52
      $region51: #{teacher_forward.2} parent=47 // pred_region
        %p418 = scmp.lt.s32.totalorder %s20, 1
        %s419 = scalar_select %p418, %s20, 1
        %s420 = scalar_lea.vmem %s3, %s419
      $region52: #{teacher_forward.2} parent=47 // pred_fallthru
        _
    $region48: #{teacher_forward.2} parent=5 // pred_fallthru
      _
  $region6: #{teacher_forward.2} parent=0 // loop_footer
    %s13 = sadd.s32 1, %s9
  $region7: #{teacher_forward.2} parent=0 // loop_footer_branch
    %8 = sbr.rel target = $region3
  $region8: #{teacher_forward.2} parent=0 // loop_exit
    _

// kernel: teacher_forward.3
$region0: #{teacher_forward.3}
  #allocation0 [shape = 'u32[]', space=smem, size = 0x4, offset = 0x4, fixed_abs, tag = 'smem constant byte address 0x4 - core index']
  #allocation1 [shape = 'u32[72,128]{1,0:T(1,128)}', space=vmem, size = 0x9000, scoped, tag = 'internal scratch']
  %s0 = inlined_call_operand.vmem [shape: f32[2,128], index: 0, kind: input, shape index: {}]
  %s1 = inlined_call_operand.vmem [shape: f32[128,32], index: 1, kind: input, shape index: {}]
  %s2 = inlined_call_operand.vmem [shape: f32[1,32], index: 2, kind: input, shape index: {}]
  %s3 = inlined_call_operand.vmem [shape: f32[32,128], index: 3, kind: input, shape index: {}]
  %s4 = inlined_call_operand.vmem [shape: f32[1,128], index: 4, kind: input, shape index: {}]
  %s5 = inlined_call_operand.vmem [shape: f32[128,128], index: 5, kind: input, shape index: {}]
  %s6 = inlined_call_operand.vmem [shape: f32[1,128], index: 6, kind: input, shape index: {}]
  %s7 = inlined_call_operand.hbm [shape: f32[2,128], index: 7, kind: output, shape index: {}]
  %s8 = sld [smem:[#allocation0]]
  $region38: #{teacher_forward.3} parent=0
    _
  %s10 = ssub.s32 1, %s8
  %s11 = scalar_select 0, %s10, %s8
  $region1: #{teacher_forward.3} parent=0
    #allocation2 [shape = 'u8[1024]{0}', space=vmem, size = 0x400, scoped, tag = 'output window, operand 0, single buffered']
    #allocation3 [shape = 's32[1]{0}', space=sflag, size = 0x4, scoped, tag = 'scoped memory for teacher_forward.3']
    %12 = vsyncpa [#allocation3], 0
    // Predicated region
    $region2: #{teacher_forward.3} parent=1 // pred_check
      _
    $region3: #{teacher_forward.3} parent=1 // pred_check_branch
      %14 = sbr.rel (0) target = $region5
    $region4: #{teacher_forward.3} parent=1 // pred_region
      _
    $region5: #{teacher_forward.3} parent=1 // pred_fallthru
      _
    // Predicated region
    $region6: #{teacher_forward.3} parent=1 // pred_check
      _
    $region7: #{teacher_forward.3} parent=1 // pred_check_branch
      %16 = sbr.rel (0) target = $region9
    $region8: #{teacher_forward.3} parent=1 // pred_region
      _
    $region9: #{teacher_forward.3} parent=1 // pred_fallthru
      _
    // Predicated region
    $region10: #{teacher_forward.3} parent=1 // pred_check
      _
    $region11: #{teacher_forward.3} parent=1 // pred_check_branch
      %18 = sbr.rel (0) target = $region13
    $region12: #{teacher_forward.3} parent=1 // pred_region
      _
    $region13: #{teacher_forward.3} parent=1 // pred_fallthru
      _
    // Predicated region
    $region14: #{teacher_forward.3} parent=1 // pred_check
      _
    $region15: #{teacher_forward.3} parent=1 // pred_check_branch
      %20 = sbr.rel (0) target = $region17
    $region16: #{teacher_forward.3} parent=1 // pred_region
      _
    $region17: #{teacher_forward.3} parent=1 // pred_fallthru
      _
    // Predicated region
    $region18: #{teacher_forward.3} parent=1 // pred_check
      _
    $region19: #{teacher_forward.3} parent=1 // pred_check_branch
      %22 = sbr.rel (0) target = $region21
    $region20: #{teacher_forward.3} parent=1 // pred_region
      _
    $region21: #{teacher_forward.3} parent=1 // pred_fallthru
      _
    // Predicated region
    $region22: #{teacher_forward.3} parent=1 // pred_check
      _
    $region23: #{teacher_forward.3} parent=1 // pred_check_branch
      %24 = sbr.rel (0) target = $region25
    $region24: #{teacher_forward.3} parent=1 // pred_region
      _
    $region25: #{teacher_forward.3} parent=1 // pred_fallthru
      _
    // Predicated region
    $region26: #{teacher_forward.3} parent=1 // pred_check
      _
    $region27: #{teacher_forward.3} parent=1 // pred_check_branch
      %26 = sbr.rel (0) target = $region29
    $region28: #{teacher_forward.3} parent=1 // pred_region
      _
    $region29: #{teacher_forward.3} parent=1 // pred_fallthru
      _
    %v27 = vld [vmem:[%s0] sm:$0x3]
    %v28 = vld [vmem:[%s1] sm:$0xff]
    %v29 = vld [vmem:[%s1 + $0x8] sm:$0xff]
    %v30 = vld [vmem:[%s1 + $0x10] sm:$0xff]
    %v31 = vld [vmem:[%s1 + $0x18] sm:$0xff]
    %v32 = vld [vmem:[%s1 + $0x20] sm:$0xff]
    %v33 = vld [vmem:[%s1 + $0x28] sm:$0xff]
    %v34 = vld [vmem:[%s1 + $0x30] sm:$0xff]
    %v35 = vld [vmem:[%s1 + $0x38] sm:$0xff]
    %v36 = vld [vmem:[%s1 + $0x40] sm:$0xff]
    %v37 = vld [vmem:[%s1 + $0x48] sm:$0xff]
    %v38 = vld [vmem:[%s1 + $0x50] sm:$0xff]
    %v39 = vld [vmem:[%s1 + $0x58] sm:$0xff]
    %v40 = vld [vmem:[%s1 + $0x60] sm:$0xff]
    %v41 = vld [vmem:[%s1 + $0x68] sm:$0xff]
    %v42 = vld [vmem:[%s1 + $0x70] sm:$0xff]
    %v43 = vld [vmem:[%s1 + $0x78] sm:$0xff]
    %v44 = vld [vmem:[%s2] sm:$0x1]
    %v46 = vperm.slane %v44, 0
    %48 = vmatpush.msra.mxu0 %v43
    %49 = vmatpush.msra.mxu0 %v42
    %50 = vmatpush.msra.mxu0 %v41
    %51 = vmatpush.msra.mxu0 %v40
    %52 = vmatpush.msra.mxu0 %v39
    %53 = vmatpush.msra.mxu0 %v38
    %54 = vmatpush.msra.mxu0 %v37
    %55 = vmatpush.msra.mxu0 %v36
    %56 = vmatpush.msra.mxu0 %v35
    %57 = vmatpush.msra.mxu0 %v34
    %58 = vmatpush.msra.mxu0 %v33
    %59 = vmatpush.msra.mxu0 %v32
    %60 = vmatpush.msra.mxu0 %v31
    %61 = vmatpush.msra.mxu0 %v30
    %62 = vmatpush.msra.mxu0 %v29
    %63 = vmatpush.msra.mxu0 %v28
    %64 = vmatmul.f32.gmra.mxu0 %v27
    %v65 = vpop.f32.mrf.mxu0
    %v66 = vadd.f32 %v46, %v65
    %67 = vdwg.mxu0
    %v68 = vmax.f32 %v66, 0.0
    %v69 = vld [vmem:[%s3] sm:$0xff]
    %v70 = vld [vmem:[%s3 + $0x8] sm:$0xff]
    %v71 = vld [vmem:[%s3 + $0x10] sm:$0xff]
    %v72 = vld [vmem:[%s3 + $0x18] sm:$0xff]
    %v73 = vld [vmem:[%s4] sm:$0x1]
    %v75 = vperm.slane %v73, 0
    %vm77 = vcmask 261120
    %v79 = vsel %vm77, %v68, 0
    %81 = vmatpush.msra.mxu0 0.0
    %82 = vmatpush.msra.mxu0 0.0
    %83 = vmatpush.msra.mxu0 0.0
    %84 = vmatpush.msra.mxu0 0.0
    %85 = vmatpush.msra.mxu0 0.0
    %86 = vmatpush.msra.mxu0 0.0
    %87 = vmatpush.msra.mxu0 0.0
    %88 = vmatpush.msra.mxu0 0.0
    %89 = vmatpush.msra.mxu0 0.0
    %90 = vmatpush.msra.mxu0 0.0
    %91 = vmatpush.msra.mxu0 0.0
    %92 = vmatpush.msra.mxu0 0.0
    %93 = vmatpush.msra.mxu0 %v72
    %94 = vmatpush.msra.mxu0 %v71
    %95 = vmatpush.msra.mxu0 %v70
    %96 = vmatpush.msra.mxu0 %v69
    %97 = vmatmul.f32.gmra.mxu0 %v79
    %v98 = vpop.f32.mrf.mxu0
    %v99 = vadd.f32 %v75, %v98
    %100 = vdwg.mxu0
    %v101 = vxor.u32 %v99, 2147483648
    %v102 = vmul.f32 %v101, 1.442695
    %v103 = vpow.pop %v102
    %v104 = vadd.f32 %v103, 1.0
    %v105 = vrcp.pop %v104
    %v106 = vmul.f32 %v104, %v105
    %v107 = vsub.f32 1.0, %v106
    %v108 = vmul.f32 %v105, %v107
    %v109 = vadd.f32 %v105, %v108
    %vm110 = vweird.f32 %v104
    %vm111 = vweird.f32 %v105
    %vm112 = vmor %vm110, %vm111
    %v113 = vsel %vm112, %v105, %v109
    %v114 = vand.u32 2147483647, %v104
    %vm115 = vcmp.eq.f32.partialorder %v114, 8.507059e+37
    %v116 = vand.u32 %v104, 2147483648
    %v117 = vor.u32 1.1754944e-38, %v116
    %v118 = vsel %vm115, %v117, %v113
    %v119 = vmul.f32 1.0, %v118
    %v120 = vmul.f32 %v27, %v119
    %v121 = vld [vmem:[%s5] sm:$0xff]
    %v122 = vld [vmem:[%s5 + $0x8] sm:$0xff]
    %v123 = vld [vmem:[%s5 + $0x10] sm:$0xff]
    %v124 = vld [vmem:[%s5 + $0x18] sm:$0xff]
    %v125 = vld [vmem:[%s5 + $0x20] sm:$0xff]
    %v126 = vld [vmem:[%s5 + $0x28] sm:$0xff]
    %v127 = vld [vmem:[%s5 + $0x30] sm:$0xff]
    %v128 = vld [vmem:[%s5 + $0x38] sm:$0xff]
    %v129 = vld [vmem:[%s5 + $0x40] sm:$0xff]
    %v130 = vld [vmem:[%s5 + $0x48] sm:$0xff]
    %v131 = vld [vmem:[%s5 + $0x50] sm:$0xff]
    %v132 = vld [vmem:[%s5 + $0x58] sm:$0xff]
    %v133 = vld [vmem:[%s5 + $0x60] sm:$0xff]
    %v134 = vld [vmem:[%s5 + $0x68] sm:$0xff]
    %v135 = vld [vmem:[%s5 + $0x70] sm:$0xff]
    %v136 = vld [vmem:[%s5 + $0x78] sm:$0xff]
    %v137 = vld [vmem:[%s6] sm:$0x1]
    %v139 = vperm.slane %v137, 0
    %141 = vmatpush.msra.mxu0 %v136
    %142 = vmatpush.msra.mxu0 %v135
    %143 = vmatpush.msra.mxu0 %v134
    %144 = vmatpush.msra.mxu0 %v133
    %145 = vmatpush.msra.mxu0 %v132
    %146 = vmatpush.msra.mxu0 %v131
    %147 = vmatpush.msra.mxu0 %v130
    %148 = vmatpush.msra.mxu0 %v129
    %149 = vmatpush.msra.mxu0 %v128
    %150 = vmatpush.msra.mxu0 %v127
    %151 = vmatpush.msra.mxu0 %v126
    %152 = vmatpush.msra.mxu0 %v125
    %153 = vmatpush.msra.mxu0 %v124
    %154 = vmatpush.msra.mxu0 %v123
    %155 = vmatpush.msra.mxu0 %v122
    %156 = vmatpush.msra.mxu0 %v121
    %157 = vmatmul.f32.gmra.mxu0 %v120
    %v158 = vpop.f32.mrf.mxu0
    %v159 = vadd.f32 %v139, %v158
    %160 = vdwg.mxu0
    %161 = vst [vmem:[#allocation2] sm:$0x3] %v159
    // Predicated region
    $region30: #{teacher_forward.3} parent=1 // pred_check
      _
    $region31: #{teacher_forward.3} parent=1 // pred_check_branch
      %163 = sbr.rel (0) target = $region33
    $region32: #{teacher_forward.3} parent=1 // pred_region
      %165 = vsyncadd [#allocation3], 0
      %s167 = sshll.u32 [#allocation2], 4
      %s168 = int_to_ptr.vmem [resolvable:$true] %s167
      %s169 = sshll.u32 %s7, 4
      %s170 = int_to_ptr.hbm [resolvable:$true] %s169
      %172 = dma.vmem_to_hbm [thread:$0]  %s168, 32, %s170, [#allocation3]
    $region33: #{teacher_forward.3} parent=1 // pred_fallthru
      _
    // Predicated region
    $region34: #{teacher_forward.3} parent=1 // pred_check
      _
    $region35: #{teacher_forward.3} parent=1 // pred_check_branch
      %174 = sbr.rel (0) target = $region37
    $region36: #{teacher_forward.3} parent=1 // pred_region
      %176 = dma.done [#allocation3], 32
    $region37: #{teacher_forward.3} parent=1 // pred_fallthru
      _
    %177 = vsyncpa [#allocation3], 1

</llo_original>
